<compile_context>
chip_gen: v5e
topology: v5e:2x2
jax: 0.10.0
libtpu: 0.0.40
codegen_flags: <defaults>
</compile_context>

<pallas_src>
import jax
import jax.numpy as jnp
import numpy as np
from jax import lax
from jax.experimental import pallas as pl
from jax.experimental.pallas import tpu as pltpu


def _round_up(x, m):
    return ((x + m - 1) // m) * m


def _largest_divisor_leq(n, cap):
    cap = max(1, min(n, cap))
    for d in range(cap, 0, -1):
        if n % d == 0:
            return d
    return 1


# ---------------- kernel 1: conv (im2col matmul, bf16 MXU) + BN shift + ReLU ----------
def _conv_bn_relu_kernel(p_ref, w_ref, b_ref, o_ref):
    # p_ref: (1, TH, OW, Kp) bf16 patch tile; w_ref: (Kp, Cp) bf16 BN-scaled weights;
    # b_ref: (1, Cp) f32 folded bias/shift; o_ref: (1, TH, OW, Cp) bf16.
    th, ow, kp = p_ref.shape[1], p_ref.shape[2], p_ref.shape[3]
    cp = o_ref.shape[3]
    p = p_ref[...].reshape(th * ow, kp)                       # merge major dims only
    acc = jnp.dot(p, w_ref[...], preferred_element_type=jnp.float32)   # MXU, f32 acc
    y = jnp.maximum(acc + b_ref[...], 0.0)                    # BN shift + ReLU (VPU)
    o_ref[...] = y.reshape(1, th, ow, cp).astype(o_ref.dtype)  # bf16 lane-dense store


# ---------------- kernel 2: 3x3 / stride-2 max pool, fully in-kernel ------------------
def _maxpool_kernel(y_ref, o_ref, pad_ref):
    # y_ref:   (1, OH, OW, C) bf16 post-ReLU conv output block.
    # o_ref:   (1, PH, PW, C) f32 pooled output block.
    # pad_ref: (2*PH+2, 2*PW+2, C) f32 VMEM scratch.
    # Zero padding (instead of -inf) is valid ONLY because the input is post-ReLU (>=0).
    oh, ow = y_ref.shape[1], y_ref.shape[2]
    ph, pw, c = o_ref.shape[1], o_ref.shape[2], o_ref.shape[3]

    pad_ref[...] = jnp.zeros_like(pad_ref)
    pad_ref[1:1 + oh, 1:1 + ow, :] = y_ref[0].astype(jnp.float32)

    # W direction first: three taps, each a stride-2 sublane read from the VMEM scratch.
    w0 = pad_ref[:, pl.ds(0, pw, stride=2), :]
    w1 = pad_ref[:, pl.ds(1, pw, stride=2), :]
    w2 = pad_ref[:, pl.ds(2, pw, stride=2), :]
    wmax = jnp.maximum(jnp.maximum(w0, w1), w2)               # (2*PH+2, PW, C)

    # H direction: parity split via a layout-free major-dim reshape, then three taps.
    r = wmax.reshape(ph + 1, 2, pw, c)
    even = r[:, 0]                                            # padded rows 0,2,...,2PH
    odd = r[:, 1]                                             # padded rows 1,3,...,2PH+1
    m = jnp.maximum(jnp.maximum(even[:ph], odd[:ph]), even[1:])
    o_ref[...] = m.reshape(o_ref.shape)


def resnet_front_forward(x_nchw, w, b, gamma, beta, running_mean, running_var,
                         eps=1e-5):
    N, Cin, H, W = x_nchw.shape
    Cout, _, KH, KW = w.shape
    stride, pad = 2, 3
    OH = (H + 2 * pad - KH) // stride + 1
    OW = (W + 2 * pad - KW) // stride + 1
    PH = (OH + 2 - 3) // 2 + 1
    PW = (OW + 2 - 3) // 2 + 1

    K = KH * KW * Cin
    Kp = _round_up(K, 128)                 # 147 -> 256: lane-aligned contraction dim
    Cp = _round_up(Cout, 128)              # 64  -> 128: lane-dense output stores

    # ---- glue: NCHW -> NHWC (bf16!), pad, im2col tap gather (pure data movement) ----
    # TODO(synk): build patch tiles in-kernel from a halo window over the padded NHWC
    # input so the (N, OH, OW, Kp) patches tensor never exists in HBM.
    x = jnp.transpose(x_nchw, (0, 2, 3, 1)).astype(jnp.bfloat16)
    xp = jnp.pad(x, ((0, 0), (pad, pad), (pad, pad), (0, 0)))
    taps = [xp[:, kh:kh + stride * OH:stride, kw:kw + stride * OW:stride, :]
            for kh in range(KH) for kw in range(KW)]
    patches = jnp.stack(taps, axis=3).reshape(N, OH, OW, K)
    patches = jnp.pad(patches, ((0, 0), (0, 0), (0, 0), (0, Kp - K)))

    # Fold conv bias + BatchNorm (eval) into per-channel scale/shift; fold the scale
    # into the weights so the kernel epilogue is add + max only.
    inv_std = 1.0 / jnp.sqrt(running_var + eps)
    scale = gamma * inv_std
    shift = beta - running_mean * scale
    bias_eff = (b * scale + shift).reshape(1, Cout)

    w2 = jnp.transpose(w, (2, 3, 1, 0)).reshape(K, Cout) * scale.reshape(1, Cout)
    w2 = jnp.pad(w2, ((0, Kp - K), (0, Cp - Cout))).astype(jnp.bfloat16)
    bias_eff = jnp.pad(bias_eff, ((0, 0), (0, Cp - Cout))).astype(jnp.float32)

    # Conv row tile: up to ~2048 patch rows per grid step (sweeps show ~86% of HBM
    # roofline by ~1024 rows); TH must divide OH so the output block maps exactly.
    TH = _largest_divisor_leq(OH, max(1, 2048 // max(OW, 1)))

    # ---- Pallas kernel 1: tiled conv matmul + BN + ReLU, direct (N,OH,OW,Cp) bf16 ----
    y = pl.pallas_call(
        _conv_bn_relu_kernel,
        out_shape=jax.ShapeDtypeStruct((N, OH, OW, Cp), jnp.bfloat16),
        grid=(N, OH // TH),
        in_specs=[
            pl.BlockSpec((1, TH, OW, Kp), lambda n, h: (n, h, 0, 0)),  # streamed patches
            pl.BlockSpec((Kp, Cp), lambda n, h: (0, 0)),               # resident weights
            pl.BlockSpec((1, Cp), lambda n, h: (0, 0)),                # resident shift
        ],
        out_specs=pl.BlockSpec((1, TH, OW, Cp), lambda n, h: (n, h, 0, 0)),
        compiler_params=pltpu.CompilerParams(
            dimension_semantics=("parallel", "parallel")),
    )(patches, w2, bias_eff)

    # ---- Pallas kernel 2: 3x3/s2 max pool straight from y (no wrapper pad/slices) ----
    # TODO(synk): at ImageNet scale on v5e, tile this over pooled rows (grid (N, PH//TPH)
    # with a 1-row halo) or raise vmem_limit_bytes; per-batch blocks fit v6e/v7x fine.
    pooled = pl.pallas_call(
        _maxpool_kernel,
        out_shape=jax.ShapeDtypeStruct((N, PH, PW, Cp), jnp.float32),
        grid=(N,),
        in_specs=[pl.BlockSpec((1, OH, OW, Cp), lambda n: (n, 0, 0, 0))],
        out_specs=pl.BlockSpec((1, PH, PW, Cp), lambda n: (n, 0, 0, 0)),
        scratch_shapes=[pltpu.VMEM((2 * PH + 2, 2 * PW + 2, Cp), jnp.float32)],
        compiler_params=pltpu.CompilerParams(
            dimension_semantics=("parallel",)),
    )(y)

    # Drop the channel padding, back to NCHW (small, output-sized op).
    return jnp.transpose(pooled[:, :, :, :Cout], (0, 3, 1, 2))


def reference_forward(x, w, b, gamma, beta, mean, var, eps=1e-5):
    # Pure-JAX reference (lax.conv + BN + ReLU + reduce_window max pool).
    y = lax.conv_general_dilated(
        x, w, window_strides=(2, 2), padding=((3, 3), (3, 3)),
        dimension_numbers=('NCHW', 'OIHW', 'NCHW'),
        precision=lax.Precision.HIGHEST)
    y = y + b.reshape(1, -1, 1, 1)
    y = (gamma.reshape(1, -1, 1, 1) * (y - mean.reshape(1, -1, 1, 1))
         / jnp.sqrt(var.reshape(1, -1, 1, 1) + eps) + beta.reshape(1, -1, 1, 1))
    y = jnp.maximum(y, 0.0)
    y = lax.reduce_window(y, -jnp.inf, lax.max,
                          window_dimensions=(1, 1, 3, 3),
                          window_strides=(1, 1, 2, 2),
                          padding=((0, 0), (0, 0), (1, 1), (1, 1)))
    return y


if __name__ == "__main__":
    key = jax.random.PRNGKey(0)
    kx, kw, kb, kg, kbe, km, kv = jax.random.split(key, 7)

    # small shapes consistent with the module: N=2, Cin=3, H=W=16
    x = jax.random.normal(kx, (2, 3, 16, 16), dtype=jnp.float32)

    # deterministic synthetic parameters (nn.Conv2d(3,64,7) / BatchNorm2d(64))
    w = 0.05 * jax.random.normal(kw, (64, 3, 7, 7), dtype=jnp.float32)
    b = 0.10 * jax.random.normal(kb, (64,), dtype=jnp.float32)
    gamma = 1.0 + 0.1 * jax.random.normal(kg, (64,), dtype=jnp.float32)
    beta = 0.1 * jax.random.normal(kbe, (64,), dtype=jnp.float32)
    running_mean = 0.05 * jax.random.normal(km, (64,), dtype=jnp.float32)
    running_var = 0.5 + jax.random.uniform(kv, (64,), dtype=jnp.float32)

    out = resnet_front_forward(x, w, b, gamma, beta, running_mean, running_var)
    out = jax.block_until_ready(out)

    ref = jax.block_until_ready(
        reference_forward(x, w, b, gamma, beta, running_mean, running_var))

    assert out.shape == (2, 64, 4, 4), out.shape
    # bf16 input/weights on the MXU (f32 accumulation) and a bf16 intermediate
    # activation -> slightly looser tolerance than pure f32.
    np.testing.assert_allclose(np.asarray(out), np.asarray(ref),
                               rtol=2e-2, atol=2e-2)
    print("KERNEL_OK")
</pallas_src>

<mosaic_0001>
module attributes {stable_mosaic.version = 11 : i64} {
  func.func @_conv_bn_relu_kernel(%arg0: i32, %arg1: i32, %arg2: memref<1x8x8x256xbf16, #tpu.memory_space<vmem>>, %arg3: memref<256x128xbf16, #tpu.memory_space<vmem>>, %arg4: memref<1x128xf32, #tpu.memory_space<vmem>>, %arg5: memref<1x8x8x128xbf16, #tpu.memory_space<vmem>>) attributes {dimension_semantics = [#tpu.dimension_semantics<parallel>, #tpu.dimension_semantics<parallel>], iteration_bounds = array<i64: 2, 1>, scalar_prefetch = 0 : i64, scratch_operands = 0 : i64, tpu.core_type = #tpu.core_type<tc>, window_params = [{transform_indices = @transform_0, window_bounds = array<i64: 1, 8, 8, 256>}, {pipeline_mode = #tpu.pipeline_mode<synchronous>, transform_indices = @transform_1, window_bounds = array<i64: 256, 128>}, {pipeline_mode = #tpu.pipeline_mode<synchronous>, transform_indices = @transform_2, window_bounds = array<i64: 1, 128>}, {transform_indices = @transform_3, window_bounds = array<i64: 1, 8, 8, 128>}]} {
    %c0 = arith.constant 0 : index
    %c0_0 = arith.constant 0 : index
    %c0_1 = arith.constant 0 : index
    %c0_2 = arith.constant 0 : index
    %0 = vector.load %arg2[%c0, %c0_0, %c0_1, %c0_2] : memref<1x8x8x256xbf16, #tpu.memory_space<vmem>>, vector<1x8x8x256xbf16>
    %1 = vector.shape_cast %0 : vector<1x8x8x256xbf16> to vector<64x256xbf16>
    %c0_3 = arith.constant 0 : index
    %c0_4 = arith.constant 0 : index
    %2 = vector.load %arg3[%c0_3, %c0_4] : memref<256x128xbf16, #tpu.memory_space<vmem>>, vector<256x128xbf16>
    %cst = arith.constant dense<0.000000e+00> : vector<64x128xf32>
    %3 = tpu.matmul %1, %2, %cst {dimension_numbers = #tpu.dot_dimension_numbers<[1], [0], [0], [1], [0, 0, 1, 1], [], []>} : vector<64x256xbf16>, vector<256x128xbf16>, vector<64x128xf32> -> vector<64x128xf32>
    %c0_5 = arith.constant 0 : index
    %c0_6 = arith.constant 0 : index
    %4 = vector.load %arg4[%c0_5, %c0_6] : memref<1x128xf32, #tpu.memory_space<vmem>>, vector<1x128xf32>
    %5 = vector.broadcast %4 : vector<1x128xf32> to vector<64x128xf32>
    %6 = arith.addf %3, %5 : vector<64x128xf32>
    %cst_7 = arith.constant 0.000000e+00 : f32
    %7 = vector.broadcast %cst_7 : f32 to vector<64x128xf32>
    %8 = arith.maximumf %6, %7 : vector<64x128xf32>
    %9 = vector.shape_cast %8 : vector<64x128xf32> to vector<1x8x8x128xf32>
    %10 = arith.truncf %9 : vector<1x8x8x128xf32> to vector<1x8x8x128xbf16>
    %c0_8 = arith.constant 0 : index
    %c0_9 = arith.constant 0 : index
    %c0_10 = arith.constant 0 : index
    %c0_11 = arith.constant 0 : index
    %11 = vector.load %arg5[%c0_8, %c0_9, %c0_10, %c0_11] : memref<1x8x8x128xbf16, #tpu.memory_space<vmem>>, vector<1x8x8x128xbf16>
    tpu.vector_store %arg5[%c0_8, %c0_9, %c0_10, %c0_11], %10 {strides = array<i32>} : memref<1x8x8x128xbf16, #tpu.memory_space<vmem>>, vector<1x8x8x128xbf16>,
    return
  }
  func.func @transform_0(%arg0: i32, %arg1: i32) -> (i32, i32, i32, i32) {
    %c0_i32 = arith.constant 0 : i32
    %c0_i32_0 = arith.constant 0 : i32
    %c0_i32_1 = arith.constant 0 : i32
    return %arg0, %arg1, %c0_i32, %c0_i32_0 : i32, i32, i32, i32
  }
  func.func @transform_1(%arg0: i32, %arg1: i32) -> (i32, i32) {
    %c0_i32 = arith.constant 0 : i32
    %c0_i32_0 = arith.constant 0 : i32
    %c0_i32_1 = arith.constant 0 : i32
    return %c0_i32, %c0_i32_0 : i32, i32
  }
  func.func @transform_2(%arg0: i32, %arg1: i32) -> (i32, i32) {
    %c0_i32 = arith.constant 0 : i32
    %c0_i32_0 = arith.constant 0 : i32
    %c0_i32_1 = arith.constant 0 : i32
    return %c0_i32, %c0_i32_0 : i32, i32
  }
  func.func @transform_3(%arg0: i32, %arg1: i32) -> (i32, i32, i32, i32) {
    %c0_i32 = arith.constant 0 : i32
    %c0_i32_0 = arith.constant 0 : i32
    %c0_i32_1 = arith.constant 0 : i32
    return %arg0, %arg1, %c0_i32, %c0_i32_0 : i32, i32, i32, i32
  }
}

</mosaic_0001>

<llo_original>
// kernel: tpu_custom_call.1
$region0: #{tpu_custom_call.1}
  #allocation0 [shape = 'u32[]', space=smem, size = 0x4, offset = 0x4, fixed_abs, tag = 'smem constant byte address 0x4 - core index']
  #allocation1 [shape = 'u32[72,128]{1,0:T(1,128)}', space=vmem, size = 0x9000, scoped, tag = 'internal scratch']
  %s0 = inlined_call_operand.hbm [shape: bf16[2,8,8,256], index: 0, kind: input, shape index: {}]
  %s1 = inlined_call_operand.hbm [shape: bf16[256,128], index: 1, kind: input, shape index: {}]
  %s2 = inlined_call_operand.vmem [shape: f32[1,128], index: 2, kind: input, shape index: {}]
  %s3 = inlined_call_operand.hbm [shape: bf16[2,8,8,128], index: 3, kind: output, shape index: {}]
  %s4 = sld [smem:[#allocation0]]
  $region53: #{tpu_custom_call.1} parent=0
    _
  %s6 = ssub.s32 1, %s4
  %s7 = scalar_select 0, %s6, %s4
  $region1: #{tpu_custom_call.1} parent=0
    #allocation2 [shape = 'u8[65536]{0}', space=vmem, size = 0x10000, scoped, tag = 'input window, operand 0']
    #allocation3 [shape = 's32[2]{0}', space=sflag, size = 0x8, scoped, tag = 'scoped memory for tpu_custom_call.1']
    #allocation4 [shape = 's32[2]{0}', space=sflag, size = 0x8, scoped, tag = 'scoped memory for tpu_custom_call.1']
    #allocation5 [shape = 'u8[65536]{0}', space=vmem, size = 0x10000, scoped, tag = 'input window, operand 1, single buffered']
    #allocation6 [shape = 's32[1]{0}', space=sflag, size = 0x4, scoped, tag = 'scoped memory for tpu_custom_call.1']
    #allocation7 [shape = 'u8[32768]{0}', space=vmem, size = 0x8000, scoped, tag = 'output window, operand 0']
    %8 = vsyncpa [#allocation3], 0
    %s9 = scalar_lea.sflag [#allocation3], 1
    %10 = vsyncpa %s9, 0
    %11 = vsyncpa [#allocation6], 0
    %12 = vsyncpa [#allocation4], 0
    %s13 = scalar_lea.sflag [#allocation4], 1
    %14 = vsyncpa %s13, 0
    loop: start=0, step=1, limit=4
    $region2: #{tpu_custom_call.1} parent=1 // loop_pre_header
      _
    $region3: #{tpu_custom_call.1} parent=1 // loop_header
      %s16 = sphi 0, %s20
      %p17 = scmp.ge.s32.totalorder %s16, 4
      %s23 = sphi 0, %s35
      %s24 = sphi 0, %s31
      %s25 = sphi 0, %s23
      %s26 = sphi 0, %s24
      %s27 = sphi 0, %s25
      %s28 = sphi 0, %s26
      %s40 = sphi 0, %s42
      %s43 = sphi 0, %s40
      %s44 = sphi 0, %s43
      %s60 = sphi 0, %s44
      %s64 = sphi 0, %s64
      %s66 = sphi 0, %s64
      %s67 = sphi 0, %s66
      %s81 = sphi 0, %s67
      %s85 = sphi 0, %s85
      %s87 = sphi 0, %s85
      %s88 = sphi 0, %s87
      %s102 = sphi 0, %s88
      %s110 = sphi 0, %s112
      %s113 = sphi 0, %s110
      %s114 = sphi 0, %s113
      %s130 = sphi 0, %s114
    $region4: #{tpu_custom_call.1} parent=1 // loop_header_branch
      %19 = sbr.rel (%p17) target = $region8
    $region5: #{tpu_custom_call.1} parent=1 // loop_body
      %s21 = ssub.s32 %s16, 1
      %s22 = ssub.s32 %s16, 2
      %s29 = sadd.s32 1, %s24
      %p30 = scmp.ge.s32.totalorder %s29, 1
      %s31 = scalar_select %p30, 0, %s29
      %s32 = sadd.s32 1, %s23
      %s33 = scalar_select %p30, %s32, %s23
      %p34 = scmp.ge.s32.totalorder %s33, 2
      %s35 = scalar_select %p34, 0, %s33
      %s36 = ssub.s32 %s23, %s35
      %s37 = ssub.s32 %s24, %s31
      %s38 = sor.u32 %s36, %s37
      %p39 = scmp.eq.s32.totalorder %s38, 0
      %s41 = sadd.s32 %s40, 1
      %s42 = scalar_select %p39, %s40, %s41
      %p45 = pneg %p39
      %p46 = scmp.eq.s32.totalorder %s16, 1
      %p47 = por %p45, %p46
      %p48 = scmp.ne.s32.totalorder %s40, %s43
      %p49 = scmp.eq.s32.totalorder %s16, 0
      %p50 = por %p48, %p49
      %p51 = scmp.ne.s32.totalorder %s40, %s43
      %p52 = scmp.eq.s32.totalorder %s21, 1
      %p53 = por %p51, %p52
      %p54 = scmp.ne.s32.totalorder %s43, %s44
      %p55 = scmp.eq.s32.totalorder %s21, 0
      %p56 = por %p54, %p55
      %p57 = scmp.ne.s32.totalorder %s43, %s44
      %p58 = scmp.eq.s32.totalorder %s22, 1
      %p59 = por %p57, %p58
      %p61 = scmp.ne.s32.totalorder %s44, %s60
      %p62 = scmp.eq.s32.totalorder %s22, 0
      %p63 = por %p61, %p62
      %s65 = sadd.s32 %s64, 1
      %p68 = scmp.eq.s32.totalorder %s16, 1
      %p69 = scmp.ne.s32.totalorder %s64, %s66
      %p70 = scmp.eq.s32.totalorder %s16, 0
      %p71 = por %p69, %p70
      %p72 = scmp.ne.s32.totalorder %s64, %s66
      %p73 = scmp.eq.s32.totalorder %s21, 1
      %p74 = por %p72, %p73
      %p75 = scmp.ne.s32.totalorder %s66, %s67
      %p76 = scmp.eq.s32.totalorder %s21, 0
      %p77 = por %p75, %p76
      %p78 = scmp.ne.s32.totalorder %s66, %s67
      %p79 = scmp.eq.s32.totalorder %s22, 1
      %p80 = por %p78, %p79
      %p82 = scmp.ne.s32.totalorder %s67, %s81
      %p83 = scmp.eq.s32.totalorder %s22, 0
      %p84 = por %p82, %p83
      %s86 = sadd.s32 %s85, 1
      %p89 = scmp.eq.s32.totalorder %s16, 1
      %p90 = scmp.ne.s32.totalorder %s85, %s87
      %p91 = scmp.eq.s32.totalorder %s16, 0
      %p92 = por %p90, %p91
      %p93 = scmp.ne.s32.totalorder %s85, %s87
      %p94 = scmp.eq.s32.totalorder %s21, 1
      %p95 = por %p93, %p94
      %p96 = scmp.ne.s32.totalorder %s87, %s88
      %p97 = scmp.eq.s32.totalorder %s21, 0
      %p98 = por %p96, %p97
      %p99 = scmp.ne.s32.totalorder %s87, %s88
      %p100 = scmp.eq.s32.totalorder %s22, 1
      %p101 = por %p99, %p100
      %p103 = scmp.ne.s32.totalorder %s88, %s102
      %p104 = scmp.eq.s32.totalorder %s22, 0
      %p105 = por %p103, %p104
      %s106 = ssub.s32 %s23, %s35
      %s107 = ssub.s32 %s24, %s31
      %s108 = sor.u32 %s106, %s107
      %p109 = scmp.eq.s32.totalorder %s108, 0
      %s111 = sadd.s32 %s110, 1
      %s112 = scalar_select %p109, %s110, %s111
      %p115 = pneg %p109
      %p116 = scmp.eq.s32.totalorder %s16, 1
      %p117 = por %p115, %p116
      %p118 = scmp.ne.s32.totalorder %s110, %s113
      %p119 = scmp.eq.s32.totalorder %s16, 0
      %p120 = por %p118, %p119
      %p121 = scmp.ne.s32.totalorder %s110, %s113
      %p122 = scmp.eq.s32.totalorder %s21, 1
      %p123 = por %p121, %p122
      %p124 = scmp.ne.s32.totalorder %s113, %s114
      %p125 = scmp.eq.s32.totalorder %s21, 0
      %p126 = por %p124, %p125
      %p127 = scmp.ne.s32.totalorder %s113, %s114
      %p128 = scmp.eq.s32.totalorder %s22, 1
      %p129 = por %p127, %p128
      %p131 = scmp.ne.s32.totalorder %s114, %s130
      %p132 = scmp.eq.s32.totalorder %s22, 0
      %p133 = por %p131, %p132
      %p134 = scmp.le.s32.totalorder 1, %s16
      %p135 = scmp.lt.s32.totalorder %s16, 3
      %p136 = pnand %p134, %p135
      %p137 = pneg %p136
      // Predicated region
      $region9: #{tpu_custom_call.1} parent=5 // pred_check
        _
      $region10: #{tpu_custom_call.1} parent=5 // pred_check_branch
        %139 = sbr.rel (%p136) target = $region12
      $region11: #{tpu_custom_call.1} parent=5 // pred_region
        %s140 = ssub.s32 %s16, 1
        // Predicated region
        $region13: #{tpu_custom_call.1} parent=11 // pred_check
          %p141 = pneg %p77
        $region14: #{tpu_custom_call.1} parent=11 // pred_check_branch
          %143 = sbr.rel (%p141) target = $region16
        $region15: #{tpu_custom_call.1} parent=11 // pred_region
          %145 = vsyncadd [#allocation6], 0
          %s146 = sshll.u32 %s1, 4
          %s147 = int_to_ptr.hbm [resolvable:$true] %s146
          %s148 = sshll.u32 [#allocation5], 4
          %s149 = int_to_ptr.vmem [resolvable:$true] %s148
          %154 = dma.hbm_to_vmem [thread:$0]  %s147, 2048, %s149, [#allocation6], 64, 64, 4
        $region16: #{tpu_custom_call.1} parent=11 // pred_fallthru
          _
        // Predicated region
        $region17: #{tpu_custom_call.1} parent=11 // pred_check
          %p155 = pneg %p98
        $region18: #{tpu_custom_call.1} parent=11 // pred_check_branch
          %157 = sbr.rel (%p155) target = $region20
        $region19: #{tpu_custom_call.1} parent=11 // pred_region
          _
        $region20: #{tpu_custom_call.1} parent=11 // pred_fallthru
          _
      $region12: #{tpu_custom_call.1} parent=5 // pred_fallthru
        _
      %p158 = scmp.lt.s32.totalorder %s16, 2
      // Predicated region
      $region21: #{tpu_custom_call.1} parent=5 // pred_check
        %p159 = pneg %p158
      $region22: #{tpu_custom_call.1} parent=5 // pred_check_branch
        %161 = sbr.rel (%p159) target = $region24
      $region23: #{tpu_custom_call.1} parent=5 // pred_region
        // Predicated region
        $region25: #{tpu_custom_call.1} parent=23 // pred_check
          %p162 = pneg %p50
        $region26: #{tpu_custom_call.1} parent=23 // pred_check_branch
          %164 = sbr.rel (%p162) target = $region28
        $region27: #{tpu_custom_call.1} parent=23 // pred_region
          %s165 = sand.u32 %s40, 1
          %s166 = scalar_lea.sflag [#allocation3], %s165
          %s167 = sand.u32 %s40, 1
          %s168 = smul.addr %s167, 64
          %s169 = scalar_lea.vmem [#allocation2], %s168
          %s170 = smul.u32 8, %s24
          %172 = vsyncadd %s166, 0
          %s173 = smul.addr %s170, 2
          %s174 = smul.addr %s23, 16
          %s175 = sadd.s32 %s173, %s174
          %s176 = smul.addr %s175, 4
          %s177 = scalar_lea.hbm %s0, %s176
          %s178 = sshll.u32 %s177, 4
          %s179 = int_to_ptr.hbm [resolvable:$true] %s178
          %s180 = sshll.u32 %s169, 4
          %s181 = int_to_ptr.vmem [resolvable:$true] %s180
          %186 = dma.hbm_to_vmem [thread:$0]  %s179, 1024, %s181, %s166, 128, 128, 8
        $region28: #{tpu_custom_call.1} parent=23 // pred_fallthru
          _
      $region24: #{tpu_custom_call.1} parent=5 // pred_fallthru
        _
      %p187 = scmp.le.s32.totalorder 1, %s16
      %p188 = scmp.lt.s32.totalorder %s16, 3
      %p189 = pnand %p187, %p188
      %p190 = pneg %p189
      // Predicated region
      $region29: #{tpu_custom_call.1} parent=5 // pred_check
        _
      $region30: #{tpu_custom_call.1} parent=5 // pred_check_branch
        %192 = sbr.rel (%p189) target = $region32
      $region31: #{tpu_custom_call.1} parent=5 // pred_region
        %s193 = ssub.s32 %s16, 1
        %s194 = sand.u32 %s43, 1
        %s195 = scalar_lea.sflag [#allocation3], %s194
        %s196 = sand.u32 %s43, 1
        %s197 = smul.addr %s196, 64
        %s198 = scalar_lea.vmem [#allocation2], %s197
        // Predicated region
        $region33: #{tpu_custom_call.1} parent=31 // pred_check
          %p199 = pneg %p56
        $region34: #{tpu_custom_call.1} parent=31 // pred_check_branch
          %201 = sbr.rel (%p199) target = $region36
        $region35: #{tpu_custom_call.1} parent=31 // pred_region
          %203 = dma.done %s195, 1024
        $region36: #{tpu_custom_call.1} parent=31 // pred_fallthru
          _
        // Predicated region
        $region37: #{tpu_custom_call.1} parent=31 // pred_check
          %p204 = pneg %p77
        $region38: #{tpu_custom_call.1} parent=31 // pred_check_branch
          %206 = sbr.rel (%p204) target = $region40
        $region39: #{tpu_custom_call.1} parent=31 // pred_region
          %208 = dma.done [#allocation6], 2048
        $region40: #{tpu_custom_call.1} parent=31 // pred_fallthru
          _
        %s209 = sand.u32 %s43, 1
        %s210 = scalar_lea.sflag [#allocation3], %s209
        %s211 = sand.u32 %s43, 1
        %s212 = smul.addr %s211, 64
        %s213 = scalar_lea.vmem [#allocation2], %s212
        %p214 = pneg %p56
        %p215 = pneg %p53
        %p216 = pneg %p77
        %p217 = pneg %p74
        %p218 = pneg %p98
        %p219 = pneg %p95
        %p220 = pneg %p126
        %p221 = pneg %p123
        %s222 = sand.u32 %s113, 1
        %s223 = scalar_lea.sflag [#allocation4], %s222
        %s224 = sand.u32 %s113, 1
        %s225 = smul.addr %s224, 32
        %s226 = scalar_lea.vmem [#allocation7], %s225
        %s227 = smul.u32 8, %s26
        %s228 = smul.u32 8, %s26
        %v229 = vld [vmem:[%s198] sm:$0xff]
        %v230 = vld [vmem:[%s198 + $0x8] sm:$0xff]
        %v231 = vld [vmem:[%s198 + $0x10] sm:$0xff]
        %v232 = vld [vmem:[%s198 + $0x18] sm:$0xff]
        %v233 = vld [vmem:[%s198 + $0x20] sm:$0xff]
        %v234 = vld [vmem:[%s198 + $0x28] sm:$0xff]
        %v235 = vld [vmem:[%s198 + $0x30] sm:$0xff]
        %v236 = vld [vmem:[%s198 + $0x38] sm:$0xff]
        %v237 = vld [vmem:[#allocation5] sm:$0xf]
        %v238 = vld [vmem:[#allocation5 + $0x4] sm:$0xf]
        %v239 = vld [vmem:[#allocation5 + $0x8] sm:$0xf]
        %v240 = vld [vmem:[#allocation5 + $0xc] sm:$0xf]
        %v241 = vld [vmem:[#allocation5 + $0x10] sm:$0xf]
        %v242 = vld [vmem:[#allocation5 + $0x14] sm:$0xf]
        %v243 = vld [vmem:[#allocation5 + $0x18] sm:$0xf]
        %v244 = vld [vmem:[#allocation5 + $0x1c] sm:$0xf]
        %v245 = vld [vmem:[#allocation5 + $0x20] sm:$0xf]
        %v246 = vld [vmem:[#allocation5 + $0x24] sm:$0xf]
        %v247 = vld [vmem:[#allocation5 + $0x28] sm:$0xf]
        %v248 = vld [vmem:[#allocation5 + $0x2c] sm:$0xf]
        %v249 = vld [vmem:[#allocation5 + $0x30] sm:$0xf]
        %v250 = vld [vmem:[#allocation5 + $0x34] sm:$0xf]
        %v251 = vld [vmem:[#allocation5 + $0x38] sm:$0xf]
        %v252 = vld [vmem:[#allocation5 + $0x3c] sm:$0xf]
        %v253 = vld [vmem:[#allocation5 + $0x40] sm:$0xf]
        %v254 = vld [vmem:[#allocation5 + $0x44] sm:$0xf]
        %v255 = vld [vmem:[#allocation5 + $0x48] sm:$0xf]
        %v256 = vld [vmem:[#allocation5 + $0x4c] sm:$0xf]
        %v257 = vld [vmem:[#allocation5 + $0x50] sm:$0xf]
        %v258 = vld [vmem:[#allocation5 + $0x54] sm:$0xf]
        %v259 = vld [vmem:[#allocation5 + $0x58] sm:$0xf]
        %v260 = vld [vmem:[#allocation5 + $0x5c] sm:$0xf]
        %v261 = vld [vmem:[#allocation5 + $0x60] sm:$0xf]
        %v262 = vld [vmem:[#allocation5 + $0x64] sm:$0xf]
        %v263 = vld [vmem:[#allocation5 + $0x68] sm:$0xf]
        %v264 = vld [vmem:[#allocation5 + $0x6c] sm:$0xf]
        %v265 = vld [vmem:[#allocation5 + $0x70] sm:$0xf]
        %v266 = vld [vmem:[#allocation5 + $0x74] sm:$0xf]
        %v267 = vld [vmem:[#allocation5 + $0x78] sm:$0xf]
        %v268 = vld [vmem:[#allocation5 + $0x7c] sm:$0xf]
        %v269 = vld [vmem:[%s2] sm:$0x1]
        %v271 = vperm.slane %v269, 0
        %v281 = vunpack.c.l.b16 %v229
        %v282 = vunpack.c.h.b16 %v229
        %v283 = vunpack.c.l.b16 %v230
        %v284 = vunpack.c.h.b16 %v230
        %v285 = vunpack.c.l.b16 %v231
        %v286 = vunpack.c.h.b16 %v231
        %v287 = vunpack.c.l.b16 %v232
        %v288 = vunpack.c.h.b16 %v232
        %v289 = vunpack.c.l.b16 %v233
        %v290 = vunpack.c.h.b16 %v233
        %v291 = vunpack.c.l.b16 %v234
        %v292 = vunpack.c.h.b16 %v234
        %v293 = vunpack.c.l.b16 %v235
        %v294 = vunpack.c.h.b16 %v235
        %v295 = vunpack.c.l.b16 %v236
        %v296 = vunpack.c.h.b16 %v236
        %v297 = vpack.c.b16 %v283, %v281
        %v298 = vpack.c.b16 %v284, %v282
        %v299 = vpack.c.b16 %v287, %v285
        %v300 = vpack.c.b16 %v288, %v286
        %v301 = vpack.c.b16 %v291, %v289
        %v302 = vpack.c.b16 %v292, %v290
        %v303 = vpack.c.b16 %v295, %v293
        %v304 = vpack.c.b16 %v296, %v294
        %v345 = vunpack.c.l.b16 %v237
        %v346 = vunpack.c.l.b16 %v238
        %v347 = vunpack.c.l.b16 %v239
        %v348 = vunpack.c.l.b16 %v240
        %v349 = vunpack.c.l.b16 %v241
        %v350 = vunpack.c.l.b16 %v242
        %v351 = vunpack.c.l.b16 %v243
        %v352 = vunpack.c.l.b16 %v244
        %v353 = vunpack.c.l.b16 %v245
        %v354 = vunpack.c.l.b16 %v246
        %v355 = vunpack.c.l.b16 %v247
        %v356 = vunpack.c.l.b16 %v248
        %v357 = vunpack.c.l.b16 %v249
        %v358 = vunpack.c.l.b16 %v250
        %v359 = vunpack.c.l.b16 %v251
        %v360 = vunpack.c.l.b16 %v252
        %v361 = vunpack.c.l.b16 %v253
        %v362 = vunpack.c.l.b16 %v254
        %v363 = vunpack.c.l.b16 %v255
        %v364 = vunpack.c.l.b16 %v256
        %v365 = vunpack.c.l.b16 %v257
        %v366 = vunpack.c.l.b16 %v258
        %v367 = vunpack.c.l.b16 %v259
        %v368 = vunpack.c.l.b16 %v260
        %v369 = vunpack.c.l.b16 %v261
        %v370 = vunpack.c.l.b16 %v262
        %v371 = vunpack.c.l.b16 %v263
        %v372 = vunpack.c.l.b16 %v264
        %v373 = vunpack.c.l.b16 %v265
        %v374 = vunpack.c.l.b16 %v266
        %v375 = vunpack.c.l.b16 %v267
        %v376 = vunpack.c.l.b16 %v268
        %v377 = vpack.c.b16 %v346, %v345
        %v378 = vpack.c.b16 %v348, %v347
        %v379 = vpack.c.b16 %v350, %v349
        %v380 = vpack.c.b16 %v352, %v351
        %v381 = vpack.c.b16 %v354, %v353
        %v382 = vpack.c.b16 %v356, %v355
        %v383 = vpack.c.b16 %v358, %v357
        %v384 = vpack.c.b16 %v360, %v359
        %v385 = vpack.c.b16 %v362, %v361
        %v386 = vpack.c.b16 %v364, %v363
        %v387 = vpack.c.b16 %v366, %v365
        %v388 = vpack.c.b16 %v368, %v367
        %v389 = vpack.c.b16 %v370, %v369
        %v390 = vpack.c.b16 %v372, %v371
        %v391 = vpack.c.b16 %v374, %v373
        %v392 = vpack.c.b16 %v376, %v375
        %409 = vmatpush.bf16.msra.mxu0 %v384
        %410 = vmatpush.bf16.msra.mxu0 %v383
        %411 = vmatpush.bf16.msra.mxu0 %v382
        %412 = vmatpush.bf16.msra.mxu0 %v381
        %413 = vmatpush.bf16.msra.mxu0 %v380
        %414 = vmatpush.bf16.msra.mxu0 %v379
        %415 = vmatpush.bf16.msra.mxu0 %v378
        %416 = vmatpush.bf16.msra.mxu0 %v377
        %417 = vmatmul.bf16.gmra.mxu0 %v297
        %v418 = vpop.f32.mrf.mxu0
        %v419 = vadd.f32 %v271, %v418
        %v420 = vpop.f32.mrf.mxu0
        %v421 = vadd.f32 %v271, %v420
        %422 = vmatmul.bf16.gmra.mxu0 %v299
        %v423 = vpop.f32.mrf.mxu0
        %v424 = vadd.f32 %v271, %v423
        %v425 = vpop.f32.mrf.mxu0
        %v426 = vadd.f32 %v271, %v425
        %427 = vmatmul.bf16.gmra.mxu0 %v301
        %v428 = vpop.f32.mrf.mxu0
        %v429 = vadd.f32 %v271, %v428
        %v430 = vpop.f32.mrf.mxu0
        %v431 = vadd.f32 %v271, %v430
        %432 = vmatmul.bf16.gmra.mxu0 %v303
        %v433 = vpop.f32.mrf.mxu0
        %v434 = vadd.f32 %v271, %v433
        %v435 = vpop.f32.mrf.mxu0
        %v436 = vadd.f32 %v271, %v435
        %437 = vdwg.mxu0
        %438 = vmatpush.bf16.msra.mxu0 %v392
        %439 = vmatpush.bf16.msra.mxu0 %v391
        %440 = vmatpush.bf16.msra.mxu0 %v390
        %441 = vmatpush.bf16.msra.mxu0 %v389
        %442 = vmatpush.bf16.msra.mxu0 %v388
        %443 = vmatpush.bf16.msra.mxu0 %v387
        %444 = vmatpush.bf16.msra.mxu0 %v386
        %445 = vmatpush.bf16.msra.mxu0 %v385
        %446 = vmatmul.bf16.gmra.mxu0 %v298
        %v447 = vpop.f32.mrf.mxu0
        %v448 = vadd.f32 %v419, %v447
        %v449 = vpop.f32.mrf.mxu0
        %v450 = vadd.f32 %v421, %v449
        %451 = vmatmul.bf16.gmra.mxu0 %v300
        %v452 = vpop.f32.mrf.mxu0
        %v453 = vadd.f32 %v424, %v452
        %v454 = vpop.f32.mrf.mxu0
        %v455 = vadd.f32 %v426, %v454
        %456 = vmatmul.bf16.gmra.mxu0 %v302
        %v457 = vpop.f32.mrf.mxu0
        %v458 = vadd.f32 %v429, %v457
        %v459 = vpop.f32.mrf.mxu0
        %v460 = vadd.f32 %v431, %v459
        %461 = vmatmul.bf16.gmra.mxu0 %v304
        %v462 = vpop.f32.mrf.mxu0
        %v463 = vadd.f32 %v434, %v462
        %v464 = vpop.f32.mrf.mxu0
        %v465 = vadd.f32 %v436, %v464
        %466 = vdwg.mxu0
        %v467 = vmax.f32 %v448, 0.0
        %v468 = vmax.f32 %v450, 0.0
        %v469 = vmax.f32 %v453, 0.0
        %v470 = vmax.f32 %v455, 0.0
        %v471 = vmax.f32 %v458, 0.0
        %v472 = vmax.f32 %v460, 0.0
        %v473 = vmax.f32 %v463, 0.0
        %v474 = vmax.f32 %v465, 0.0
        %v475 = vpack.c.bf16 %v467, %v467
        %v476 = vpack.c.bf16 %v468, %v468
        %v477 = vpack.c.bf16 %v469, %v469
        %v478 = vpack.c.bf16 %v470, %v470
        %v479 = vpack.c.bf16 %v471, %v471
        %v480 = vpack.c.bf16 %v472, %v472
        %v481 = vpack.c.bf16 %v473, %v473
        %v482 = vpack.c.bf16 %v474, %v474
        %483 = vst [vmem:[%s226] sm:$0xf] %v475
        %484 = vst [vmem:[%s226 + $0x4] sm:$0xf] %v476
        %485 = vst [vmem:[%s226 + $0x8] sm:$0xf] %v477
        %486 = vst [vmem:[%s226 + $0xc] sm:$0xf] %v478
        %487 = vst [vmem:[%s226 + $0x10] sm:$0xf] %v479
        %488 = vst [vmem:[%s226 + $0x14] sm:$0xf] %v480
        %489 = vst [vmem:[%s226 + $0x18] sm:$0xf] %v481
        %490 = vst [vmem:[%s226 + $0x1c] sm:$0xf] %v482
        %s491 = sand.u32 %s113, 1
        %s492 = scalar_lea.sflag [#allocation4], %s491
        %s493 = sand.u32 %s113, 1
        %s494 = smul.addr %s493, 32
        %s495 = scalar_lea.vmem [#allocation7], %s494
        // Predicated region
        $region41: #{tpu_custom_call.1} parent=31 // pred_check
          %p496 = pneg %p123
        $region42: #{tpu_custom_call.1} parent=31 // pred_check_branch
          %498 = sbr.rel (%p496) target = $region44
        $region43: #{tpu_custom_call.1} parent=31 // pred_region
          %s499 = smul.u32 8, %s26
          %501 = vsyncadd %s492, 0
          %s502 = smul.addr %s25, 8
          %s503 = sadd.s32 %s499, %s502
          %s504 = smul.addr %s503, 4
          %s505 = scalar_lea.hbm %s3, %s504
          %s506 = sshll.u32 %s495, 4
          %s507 = int_to_ptr.vmem [resolvable:$true] %s506
          %s508 = sshll.u32 %s505, 4
          %s509 = int_to_ptr.hbm [resolvable:$true] %s508
          %514 = dma.vmem_to_hbm [thread:$0]  %s507, 512, %s509, %s492, 64, 64, 4
        $region44: #{tpu_custom_call.1} parent=31 // pred_fallthru
          _
      $region32: #{tpu_custom_call.1} parent=5 // pred_fallthru
        _
      %p515 = scmp.le.s32.totalorder 2, %s16
      // Predicated region
      $region45: #{tpu_custom_call.1} parent=5 // pred_check
        %p516 = pneg %p515
      $region46: #{tpu_custom_call.1} parent=5 // pred_check_branch
        %518 = sbr.rel (%p516) target = $region48
      $region47: #{tpu_custom_call.1} parent=5 // pred_region
        %s519 = ssub.s32 %s16, 2
        // Predicated region
        $region49: #{tpu_custom_call.1} parent=47 // pred_check
          %p520 = pneg %p129
        $region50: #{tpu_custom_call.1} parent=47 // pred_check_branch
          %522 = sbr.rel (%p520) target = $region52
        $region51: #{tpu_custom_call.1} parent=47 // pred_region
          %s523 = sand.u32 %s114, 1
          %s524 = scalar_lea.sflag [#allocation4], %s523
          %s525 = sand.u32 %s114, 1
          %s526 = smul.addr %s525, 32
          %s527 = scalar_lea.vmem [#allocation7], %s526
          %529 = dma.done %s524, 512
        $region52: #{tpu_custom_call.1} parent=47 // pred_fallthru
          _
      $region48: #{tpu_custom_call.1} parent=5 // pred_fallthru
        _
    $region6: #{tpu_custom_call.1} parent=1 // loop_footer
      %s20 = sadd.s32 1, %s16
    $region7: #{tpu_custom_call.1} parent=1 // loop_footer_branch
      %15 = sbr.rel target = $region3
    $region8: #{tpu_custom_call.1} parent=1 // loop_exit
      _
    %530 = vsyncpa [#allocation3], 1
    %s531 = scalar_lea.sflag [#allocation3], 1
    %532 = vsyncpa %s531, 1
    %533 = vsyncpa [#allocation6], 1
    %534 = vsyncpa [#allocation4], 1
    %s535 = scalar_lea.sflag [#allocation4], 1
    %536 = vsyncpa %s535, 1

</llo_original>
